<compile_context>
chip_gen: v7x
topology: tpu7x:2x2x1
jax: 0.10.0
libtpu: 0.0.40
codegen_flags: <defaults>
</compile_context>

<pallas_src>
import functools

import numpy as np
import jax
import jax.numpy as jnp
from jax import lax
from jax.experimental import pallas as pl
from jax.experimental.pallas import tpu as pltpu


def _round_up(x: int, m: int) -> int:
    return ((x + m - 1) // m) * m


# -----------------------------------------------------------------------------
# Fused kernel.
#   ids_ref : (B_TILE*Lp, 1) int32  token ids, row r = batch b, time t with r = b*Lp + t
#   tbl_ref : (V, E)        bf16    embedding table (padding_idx row already zero)
#   w_ref   : (E, kmax*Fp)  bf16    packed conv weights, tap-major: tap j occupies lanes
#                                   [j*Fp,(j+1)*Fp); inside a group, kernel-size g occupies
#                                   lanes [g*nK,(g+1)*nK); unused lanes are zero.
#   cb_ref  : (1, Fp)       f32     conv biases (per output channel, grouped per kernel size)
#   tlen_ref: (1, Fp)       int32   valid conv output length per lane: L - k + 1
#   lw_ref  : (Fp, C_pad)   f32     classifier weight (zero rows for padding lanes)
#   lb_ref  : (1, C_pad)    f32     classifier bias
#   out_ref : (B_TILE, C_pad) f32
# -----------------------------------------------------------------------------
def _fused_textcnn_kernel(ids_ref, tbl_ref, w_ref, cb_ref, tlen_ref, lw_ref, lb_ref,
                          out_ref, *, kmax, Lp):
    R = ids_ref.shape[0]                 # B_TILE * Lp
    Bt = R // Lp
    V = tbl_ref.shape[0]
    Fp = cb_ref.shape[1]

    # 1) Embedding gather fused in-kernel: one_hot(ids) @ table on the MXU. The table stays
    #    resident in VMEM, so the (B, L, E) activation never touches HBM.
    ids = ids_ref[...]                                                   # (R, 1) int32
    vocab_iota = lax.broadcasted_iota(jnp.int32, (R, V), 1)
    onehot = (vocab_iota == ids).astype(jnp.bfloat16)                    # (R, V)
    emb = jnp.dot(onehot, tbl_ref[...],
                  preferred_element_type=jnp.float32).astype(jnp.bfloat16)   # (R, E)

    # 2) All kernel sizes and all taps in ONE wide MXU matmul.
    full = jnp.dot(emb, w_ref[...], preferred_element_type=jnp.float32)  # (R, kmax*Fp)

    # 3) Tap accumulation: 128-aligned / 128-wide lane-group slices + sublane roll (XLU)
    #    instead of materialized shifted value slices. Wrapped / padded rows only land at
    #    time positions that the per-kernel-size valid-length mask removes below.
    acc = full[:, 0:Fp]
    for j in range(1, kmax):
        acc = acc + pltpu.roll(full[:, j * Fp:(j + 1) * Fp], shift=R - j, axis=0)

    # 4) Bias + ReLU + per-kernel-size valid-length mask + max-pool over time.
    x = jnp.maximum(acc + cb_ref[...], 0.0)                              # (R, Fp), >= 0
    t_idx = lax.broadcasted_iota(jnp.int32, (Lp, Fp), 0)
    mask = (t_idx < tlen_ref[...]).astype(jnp.float32)                   # (Lp, Fp)
    x = x.reshape(Bt, Lp, Fp) * mask[None]                               # invalid positions -> 0
    pooled = jnp.max(x, axis=1)                                          # (Bt, Fp) lane-contiguous

    # 5) Classifier head fused as a single matmul; lane-dense (Bt, C_pad) store.
    out_ref[...] = (jnp.dot(pooled, lw_ref[...], preferred_element_type=jnp.float32)
                    + lb_ref[...])


# -----------------------------------------------------------------------------
# Forward wrapper
# -----------------------------------------------------------------------------
@functools.partial(jax.jit, static_argnames=("ksz",))
def cnn_baseline_forward(params, text, *, ksz):
    ksz = tuple(int(k) for k in ksz)
    emb_tbl = params["embedding"]                          # (V, E) f32
    V, E = emb_tbl.shape
    B, L = text.shape
    nK = params["conv_b"][0].shape[0]
    C = params["lin_b"].shape[0]
    kmax = max(ksz)
    assert L >= kmax, "sequence length must be >= max conv kernel size"

    # TODO(synk): for vocabularies too large to keep resident in VMEM, scalar-prefetch the ids
    # and DMA-gather embedding rows from a pl.ANY-resident table instead of the one-hot matmul.
    assert V * E * 2 <= 8 * 1024 * 1024, "embedding table too large for the VMEM-resident path"

    F = len(ksz) * nK
    Fp = _round_up(F, 128)          # each tap group padded to a 128-lane multiple
    C_pad = _round_up(C, 128)       # lane-dense, unmasked output store
    Lp = _round_up(L, 8)            # time padded to the sublane granule (pad token = 1)
    nC_all = kmax * Fp

    # ---- pack parameters (tap-major conv RHS, lane-padded classifier) ----
    tbl = emb_tbl.astype(jnp.bfloat16)

    w_all = jnp.zeros((E, nC_all), jnp.float32)
    cb = jnp.zeros((1, Fp), jnp.float32)
    for g, (k, w, b) in enumerate(zip(ksz, params["conv_w"], params["conv_b"])):
        cb = cb.at[0, g * nK:(g + 1) * nK].set(b)
        for j in range(k):
            col = j * Fp + g * nK
            w_all = w_all.at[:, col:col + nK].set(w[j])
    w_all = w_all.astype(jnp.bfloat16)

    tlen = np.zeros((1, Fp), np.int32)
    for g, k in enumerate(ksz):
        tlen[0, g * nK:(g + 1) * nK] = L - k + 1
    tlen = jnp.asarray(tlen)

    lw = jnp.zeros((Fp, C_pad), jnp.float32).at[:F, :C].set(params["lin_w"].astype(jnp.float32))
    lb = jnp.zeros((1, C_pad), jnp.float32).at[0, :C].set(params["lin_b"].astype(jnp.float32))

    # ---- batch tile from a padded-footprint VMEM budget: counts (8,128) tile padding and
    #      double-buffered pipeline copies; safe on v5e/v6e (128 MiB) and v7x (64 MiB/TC) ----
    E_l = _round_up(E, 128)
    V_l = _round_up(V, 128)
    bytes_per_row = (
        Lp * 128 * 4 * 2           # ids block: (Bt*Lp, 1) int32 lane-pads to 128, double-buffered
        + Lp * V_l * 2             # one-hot intermediate (bf16)
        + Lp * E_l * 6             # gathered embedding (f32 matmul result + bf16 copy)
        + Lp * nC_all * 4          # packed conv matmul output (f32)
        + Lp * Fp * 8              # tap accumulator + relu/mask temporary (f32)
        + C_pad * 4 * 2            # logits block, double-buffered
    )
    fixed_bytes = 2 * (
        _round_up(V, 8) * E_l * 2          # embedding table (bf16)
        + _round_up(E, 8) * nC_all * 2     # packed conv weights (bf16)
        + 8 * Fp * 4 * 2                   # conv bias + valid-length rows
        + Fp * C_pad * 4 + 8 * C_pad * 4   # classifier weight + bias
    )
    VMEM_BUDGET = 16 * 1024 * 1024
    bt = (VMEM_BUDGET - fixed_bytes) // max(bytes_per_row, 1)
    bt = int(max(8, min(1024, bt)) // 8 * 8)
    if B > 1:
        # at least two grid steps so ("parallel",) can shard the batch across both
        # TensorCores on v7x (and to keep the DMA pipeline busy elsewhere).
        bt = min(bt, max(8, _round_up(pl.cdiv(B, 2), 8)))
    else:
        bt = 8
    n_steps = max(2 if B > 1 else 1, pl.cdiv(B, bt))
    B_pad = n_steps * bt

    # ---- token ids: pad batch/time with padding_idx (=1 -> zero embedding row) and present
    #      them as (B_pad*Lp, 1) so the in-kernel one-hot needs no lane<->sublane relayout ----
    ids = jnp.pad(text.astype(jnp.int32), ((0, B_pad - B), (0, Lp - L)), constant_values=1)
    ids2d = ids.reshape(B_pad * Lp, 1)

    out_padded = pl.pallas_call(
        functools.partial(_fused_textcnn_kernel, kmax=kmax, Lp=Lp),
        out_shape=jax.ShapeDtypeStruct((B_pad, C_pad), jnp.float32),
        grid=(n_steps,),
        in_specs=[
            pl.BlockSpec((bt * Lp, 1), lambda i: (i, 0)),     # token ids (batch-tiled)
            pl.BlockSpec((V, E), lambda i: (0, 0)),           # embedding table (VMEM resident)
            pl.BlockSpec((E, nC_all), lambda i: (0, 0)),      # packed conv weights
            pl.BlockSpec((1, Fp), lambda i: (0, 0)),          # conv bias
            pl.BlockSpec((1, Fp), lambda i: (0, 0)),          # valid conv output lengths
            pl.BlockSpec((Fp, C_pad), lambda i: (0, 0)),      # classifier weight (padded)
            pl.BlockSpec((1, C_pad), lambda i: (0, 0)),       # classifier bias (padded)
        ],
        out_specs=pl.BlockSpec((bt, C_pad), lambda i: (i, 0)),
        compiler_params=pltpu.CompilerParams(
            dimension_semantics=("parallel",),
            vmem_limit_bytes=32 * 1024 * 1024,
        ),
    )(ids2d, tbl, w_all, cb, tlen, lw, lb)

    # TODO(synk): nn.Dropout(0.5) is identity in eval mode; training-mode RNG mask not implemented.
    return out_padded[:B, :C]


# -----------------------------------------------------------------------------
# Pure-JAX reference (f32) for a correctness sanity check.
# -----------------------------------------------------------------------------
def _reference_forward(params, text, *, ksz):
    emb = jnp.take(params["embedding"], text, axis=0)             # (B, L, E) f32
    pooled = []
    for k, w, b in zip(ksz, params["conv_w"], params["conv_b"]):
        T = emb.shape[1] - k + 1
        conv = sum(jnp.einsum("ble,ec->blc", emb[:, j:j + T, :], w[j]) for j in range(k)) + b
        pooled.append(jnp.max(jax.nn.relu(conv), axis=1))
    flat = jnp.concatenate(pooled, axis=1)
    return flat @ params["lin_w"] + params["lin_b"]


def init_params(key, *, vocab_size, embedding_dim, nKernel, ksz, number_class):
    keys = jax.random.split(key, 1 + 2 * len(ksz) + 2)
    ki = iter(keys)

    emb_tbl = jax.random.normal(next(ki), (vocab_size, embedding_dim), jnp.float32)
    emb_tbl = emb_tbl.at[1].set(0.0)  # padding_idx=1

    conv_w, conv_b = [], []
    for k in ksz:
        conv_w.append(0.1 * jax.random.normal(next(ki), (k, embedding_dim, nKernel), jnp.float32))
        conv_b.append(0.1 * jax.random.normal(next(ki), (nKernel,), jnp.float32))

    F = len(ksz) * nKernel
    lin_w = 0.1 * jax.random.normal(next(ki), (F, number_class), jnp.float32)
    lin_b = 0.1 * jax.random.normal(next(ki), (number_class,), jnp.float32)

    return {
        "embedding": emb_tbl,
        "conv_w": conv_w,
        "conv_b": conv_b,
        "lin_w": lin_w,
        "lin_b": lin_b,
    }


if __name__ == "__main__":
    # Small shapes consistent with the module.
    vocab_size = 50
    embedding_dim = 32
    nKernel = 8
    ksz = (2, 3)
    number_class = 5
    B, L = 2, 16

    key = jax.random.PRNGKey(0)
    pkey, tkey = jax.random.split(key)
    params = init_params(
        pkey,
        vocab_size=vocab_size,
        embedding_dim=embedding_dim,
        nKernel=nKernel,
        ksz=ksz,
        number_class=number_class,
    )
    text = jax.random.randint(tkey, (B, L), 0, vocab_size, dtype=jnp.int32)

    out = cnn_baseline_forward(params, text, ksz=ksz)
    out = jax.block_until_ready(out)
    assert out.shape == (B, number_class), out.shape

    ref = _reference_forward(params, text, ksz=ksz)
    assert bool(jnp.allclose(out, ref, atol=5e-2, rtol=5e-2)), "mismatch vs f32 reference"

    print("KERNEL_OK")
</pallas_src>

<mosaic_0001>
module attributes {stable_mosaic.version = 11 : i64} {
  func.func @_fused_textcnn_kernel(%arg0: i32, %arg1: memref<128x1xi32, #tpu.memory_space<vmem>>, %arg2: memref<50x32xbf16, #tpu.memory_space<vmem>>, %arg3: memref<32x384xbf16, #tpu.memory_space<vmem>>, %arg4: memref<1x128xf32, #tpu.memory_space<vmem>>, %arg5: memref<1x128xi32, #tpu.memory_space<vmem>>, %arg6: memref<128x128xf32, #tpu.memory_space<vmem>>, %arg7: memref<1x128xf32, #tpu.memory_space<vmem>>, %arg8: memref<8x128xf32, #tpu.memory_space<vmem>>) attributes {dimension_semantics = [#tpu.dimension_semantics<parallel>], iteration_bounds = array<i64: 2>, scalar_prefetch = 0 : i64, scratch_operands = 0 : i64, tpu.core_type = #tpu.core_type<tc>, window_params = [{transform_indices = @transform_0, window_bounds = array<i64: 128, 1>}, {pipeline_mode = #tpu.pipeline_mode<synchronous>, transform_indices = @transform_1, window_bounds = array<i64: 50, 32>}, {pipeline_mode = #tpu.pipeline_mode<synchronous>, transform_indices = @transform_2, window_bounds = array<i64: 32, 384>}, {pipeline_mode = #tpu.pipeline_mode<synchronous>, transform_indices = @transform_3, window_bounds = array<i64: 1, 128>}, {pipeline_mode = #tpu.pipeline_mode<synchronous>, transform_indices = @transform_4, window_bounds = array<i64: 1, 128>}, {pipeline_mode = #tpu.pipeline_mode<synchronous>, transform_indices = @transform_5, window_bounds = array<i64: 128, 128>}, {pipeline_mode = #tpu.pipeline_mode<synchronous>, transform_indices = @transform_6, window_bounds = array<i64: 1, 128>}, {transform_indices = @transform_7, window_bounds = array<i64: 8, 128>}]} {
    %c0 = arith.constant 0 : index
    %c0_0 = arith.constant 0 : index
    %0 = vector.load %arg1[%c0, %c0_0] : memref<128x1xi32, #tpu.memory_space<vmem>>, vector<128x1xi32>
    %1 = tpu.iota {dimensions = array<i32: 1>} : vector<128x50xi32>
    %2 = vector.broadcast %0 : vector<128x1xi32> to vector<128x50xi32>
    %3 = arith.cmpi eq, %1, %2 : vector<128x50xi32>
    %4 = arith.extui %3 : vector<128x50xi1> to vector<128x50xi32>
    %5 = arith.sitofp %4 : vector<128x50xi32> to vector<128x50xf32>
    %6 = arith.truncf %5 : vector<128x50xf32> to vector<128x50xbf16>
    %c0_1 = arith.constant 0 : index
    %c0_2 = arith.constant 0 : index
    %7 = vector.load %arg2[%c0_1, %c0_2] : memref<50x32xbf16, #tpu.memory_space<vmem>>, vector<50x32xbf16>
    %cst = arith.constant dense<0.000000e+00> : vector<128x32xf32>
    %8 = tpu.matmul %6, %7, %cst {dimension_numbers = #tpu.dot_dimension_numbers<[1], [0], [0], [1], [0, 0, 1, 1], [], []>} : vector<128x50xbf16>, vector<50x32xbf16>, vector<128x32xf32> -> vector<128x32xf32>
    %9 = arith.truncf %8 : vector<128x32xf32> to vector<128x32xbf16>
    %c0_3 = arith.constant 0 : index
    %c0_4 = arith.constant 0 : index
    %10 = vector.load %arg3[%c0_3, %c0_4] : memref<32x384xbf16, #tpu.memory_space<vmem>>, vector<32x384xbf16>
    %cst_5 = arith.constant dense<0.000000e+00> : vector<128x384xf32>
    %11 = tpu.matmul %9, %10, %cst_5 {dimension_numbers = #tpu.dot_dimension_numbers<[1], [0], [0], [1], [0, 0, 1, 1], [], []>} : vector<128x32xbf16>, vector<32x384xbf16>, vector<128x384xf32> -> vector<128x384xf32>
    %12 = vector.extract_strided_slice %11 {offsets = [0, 0], sizes = [128, 128], strides = [1, 1]} : vector<128x384xf32> to vector<128x128xf32>
    %13 = vector.extract_strided_slice %11 {offsets = [0, 128], sizes = [128, 128], strides = [1, 1]} : vector<128x384xf32> to vector<128x128xf32>
    %c127_i32 = arith.constant 127 : i32
    %14 = tpu.dynamic_rotate %13 by %c127_i32 dim 0 : vector<128x128xf32>, i32 -> vector<128x128xf32>
    %15 = arith.addf %12, %14 : vector<128x128xf32>
    %16 = vector.extract_strided_slice %11 {offsets = [0, 256], sizes = [128, 128], strides = [1, 1]} : vector<128x384xf32> to vector<128x128xf32>
    %c126_i32 = arith.constant 126 : i32
    %17 = tpu.dynamic_rotate %16 by %c126_i32 dim 0 : vector<128x128xf32>, i32 -> vector<128x128xf32>
    %18 = arith.addf %15, %17 : vector<128x128xf32>
    %c0_6 = arith.constant 0 : index
    %c0_7 = arith.constant 0 : index
    %19 = vector.load %arg4[%c0_6, %c0_7] : memref<1x128xf32, #tpu.memory_space<vmem>>, vector<1x128xf32>
    %20 = vector.broadcast %19 : vector<1x128xf32> to vector<128x128xf32>
    %21 = arith.addf %18, %20 : vector<128x128xf32>
    %cst_8 = arith.constant 0.000000e+00 : f32
    %22 = vector.broadcast %cst_8 : f32 to vector<128x128xf32>
    %23 = arith.maximumf %21, %22 : vector<128x128xf32>
    %24 = tpu.iota {dimensions = array<i32: 0>} : vector<16x128xi32>
    %c0_9 = arith.constant 0 : index
    %c0_10 = arith.constant 0 : index
    %25 = vector.load %arg5[%c0_9, %c0_10] : memref<1x128xi32, #tpu.memory_space<vmem>>, vector<1x128xi32>
    %26 = vector.broadcast %25 : vector<1x128xi32> to vector<16x128xi32>
    %27 = arith.cmpi slt, %24, %26 : vector<16x128xi32>
    %28 = arith.extui %27 : vector<16x128xi1> to vector<16x128xi32>
    %29 = arith.sitofp %28 : vector<16x128xi32> to vector<16x128xf32>
    %30 = vector.shape_cast %23 : vector<128x128xf32> to vector<8x16x128xf32>
    %31 = vector.shape_cast %29 : vector<16x128xf32> to vector<1x16x128xf32>
    %32 = vector.broadcast %31 : vector<1x16x128xf32> to vector<8x16x128xf32>
    %33 = arith.mulf %30, %32 : vector<8x16x128xf32>
    %cst_11 = arith.constant dense<0xFF800000> : vector<8x128xf32>
    %34 = vector.multi_reduction <maximumf>, %33, %cst_11 [1] : vector<8x16x128xf32> to vector<8x128xf32>
    %c0_12 = arith.constant 0 : index
    %c0_13 = arith.constant 0 : index
    %35 = vector.load %arg6[%c0_12, %c0_13] : memref<128x128xf32, #tpu.memory_space<vmem>>, vector<128x128xf32>
    %cst_14 = arith.constant dense<0.000000e+00> : vector<8x128xf32>
    %36 = tpu.matmul %34, %35, %cst_14 {dimension_numbers = #tpu.dot_dimension_numbers<[1], [0], [0], [1], [0, 0, 1, 1], [], []>} : vector<8x128xf32>, vector<128x128xf32>, vector<8x128xf32> -> vector<8x128xf32>
    %c0_15 = arith.constant 0 : index
    %c0_16 = arith.constant 0 : index
    %37 = vector.load %arg7[%c0_15, %c0_16] : memref<1x128xf32, #tpu.memory_space<vmem>>, vector<1x128xf32>
    %38 = vector.broadcast %37 : vector<1x128xf32> to vector<8x128xf32>
    %39 = arith.addf %36, %38 : vector<8x128xf32>
    %c0_17 = arith.constant 0 : index
    %c0_18 = arith.constant 0 : index
    %40 = vector.load %arg8[%c0_17, %c0_18] : memref<8x128xf32, #tpu.memory_space<vmem>>, vector<8x128xf32>
    tpu.vector_store %arg8[%c0_17, %c0_18], %39 {strides = array<i32>} : memref<8x128xf32, #tpu.memory_space<vmem>>, vector<8x128xf32>,
    return
  }
  func.func @transform_0(%arg0: i32) -> (i32, i32) {
    %c0_i32 = arith.constant 0 : i32
    %c0_i32_0 = arith.constant 0 : i32
    return %arg0, %c0_i32 : i32, i32
  }
  func.func @transform_1(%arg0: i32) -> (i32, i32) {
    %c0_i32 = arith.constant 0 : i32
    %c0_i32_0 = arith.constant 0 : i32
    %c0_i32_1 = arith.constant 0 : i32
    return %c0_i32, %c0_i32_0 : i32, i32
  }
  func.func @transform_2(%arg0: i32) -> (i32, i32) {
    %c0_i32 = arith.constant 0 : i32
    %c0_i32_0 = arith.constant 0 : i32
    %c0_i32_1 = arith.constant 0 : i32
    return %c0_i32, %c0_i32_0 : i32, i32
  }
  func.func @transform_3(%arg0: i32) -> (i32, i32) {
    %c0_i32 = arith.constant 0 : i32
    %c0_i32_0 = arith.constant 0 : i32
    %c0_i32_1 = arith.constant 0 : i32
    return %c0_i32, %c0_i32_0 : i32, i32
  }
  func.func @transform_4(%arg0: i32) -> (i32, i32) {
    %c0_i32 = arith.constant 0 : i32
    %c0_i32_0 = arith.constant 0 : i32
    %c0_i32_1 = arith.constant 0 : i32
    return %c0_i32, %c0_i32_0 : i32, i32
  }
  func.func @transform_5(%arg0: i32) -> (i32, i32) {
    %c0_i32 = arith.constant 0 : i32
    %c0_i32_0 = arith.constant 0 : i32
    %c0_i32_1 = arith.constant 0 : i32
    return %c0_i32, %c0_i32_0 : i32, i32
  }
  func.func @transform_6(%arg0: i32) -> (i32, i32) {
    %c0_i32 = arith.constant 0 : i32
    %c0_i32_0 = arith.constant 0 : i32
    %c0_i32_1 = arith.constant 0 : i32
    return %c0_i32, %c0_i32_0 : i32, i32
  }
  func.func @transform_7(%arg0: i32) -> (i32, i32) {
    %c0_i32 = arith.constant 0 : i32
    %c0_i32_0 = arith.constant 0 : i32
    return %arg0, %c0_i32 : i32, i32
  }
}

</mosaic_0001>

<llo_original>
// kernel: cnn_baseline_forward.1
$region0: #{cnn_baseline_forward.1}
  #allocation0 [shape = 'u32[]', space=smem, size = 0x4, offset = 0x4, fixed_abs, tag = 'smem constant byte address 0x4 - core index']
  #allocation1 [shape = 'u32[144,128]{1,0:T(1,128)}', space=vmem, size = 0x12000, scoped, tag = 'internal scratch']
  %s0 = inlined_call_operand.vmem [shape: s32[256,1], index: 0, kind: input, shape index: {}]
  %s1 = inlined_call_operand.vmem [shape: bf16[50,32], index: 1, kind: input, shape index: {}]
  %s2 = inlined_call_operand.vmem [shape: bf16[32,384], index: 2, kind: input, shape index: {}]
  %s3 = inlined_call_operand.vmem [shape: f32[1,128], index: 3, kind: input, shape index: {}]
  %s4 = inlined_call_operand.vmem [shape: s32[1,128], index: 4, kind: input, shape index: {}]
  %s5 = inlined_call_operand.vmem [shape: f32[128,128], index: 5, kind: input, shape index: {}]
  %s6 = inlined_call_operand.vmem [shape: f32[1,128], index: 6, kind: input, shape index: {}]
  %s7 = inlined_call_operand.vmem [shape: f32[16,128], index: 7, kind: output, shape index: {}]
  %s8 = sld [smem:[#allocation0]]
  $region61: #{cnn_baseline_forward.1} parent=0
    _
  %s10 = ssub.s32 1, %s8
  %s11 = scalar_select 0, %s10, %s8
  loop: start=0, step=1, limit=4
  $region2: #{cnn_baseline_forward.1} parent=0 // loop_pre_header
    _
  $region3: #{cnn_baseline_forward.1} parent=0 // loop_header
    %s13 = sphi 0, %s17
    %p14 = scmp.ge.s32.totalorder %s13, 4
    %s23 = sphi 0, %s25
    %s26 = sphi 0, %s23
    %s27 = sphi 0, %s26
    %s43 = sphi 0, %s27
    %s47 = sphi 0, %s47
    %s49 = sphi 0, %s47
    %s50 = sphi 0, %s49
    %s64 = sphi 0, %s50
    %s68 = sphi 0, %s68
    %s70 = sphi 0, %s68
    %s71 = sphi 0, %s70
    %s85 = sphi 0, %s71
    %s89 = sphi 0, %s89
    %s91 = sphi 0, %s89
    %s92 = sphi 0, %s91
    %s106 = sphi 0, %s92
    %s110 = sphi 0, %s110
    %s112 = sphi 0, %s110
    %s113 = sphi 0, %s112
    %s127 = sphi 0, %s113
    %s131 = sphi 0, %s131
    %s133 = sphi 0, %s131
    %s134 = sphi 0, %s133
    %s148 = sphi 0, %s134
    %s152 = sphi 0, %s152
    %s154 = sphi 0, %s152
    %s155 = sphi 0, %s154
    %s169 = sphi 0, %s155
    %s175 = sphi 0, %s177
    %s178 = sphi 0, %s175
    %s179 = sphi 0, %s178
    %s195 = sphi 0, %s179
  $region4: #{cnn_baseline_forward.1} parent=0 // loop_header_branch
    %16 = sbr.rel (%p14) target = $region8
  $region5: #{cnn_baseline_forward.1} parent=0 // loop_body
    %s18 = ssub.s32 %s13, 1
    %s19 = ssub.s32 %s13, 2
    %s20 = sadd.s32 %s13, 1
    %s21 = ssub.s32 %s13, %s20
    %p22 = scmp.eq.s32.totalorder %s21, 0
    %s24 = sadd.s32 %s23, 1
    %s25 = scalar_select %p22, %s23, %s24
    %p28 = pneg %p22
    %p29 = scmp.eq.s32.totalorder %s13, 1
    %p30 = por %p28, %p29
    %p31 = scmp.ne.s32.totalorder %s23, %s26
    %p32 = scmp.eq.s32.totalorder %s13, 0
    %p33 = por %p31, %p32
    %p34 = scmp.ne.s32.totalorder %s23, %s26
    %p35 = scmp.eq.s32.totalorder %s18, 1
    %p36 = por %p34, %p35
    %p37 = scmp.ne.s32.totalorder %s26, %s27
    %p38 = scmp.eq.s32.totalorder %s18, 0
    %p39 = por %p37, %p38
    %p40 = scmp.ne.s32.totalorder %s26, %s27
    %p41 = scmp.eq.s32.totalorder %s19, 1
    %p42 = por %p40, %p41
    %p44 = scmp.ne.s32.totalorder %s27, %s43
    %p45 = scmp.eq.s32.totalorder %s19, 0
    %p46 = por %p44, %p45
    %s48 = sadd.s32 %s47, 1
    %p51 = scmp.eq.s32.totalorder %s13, 1
    %p52 = scmp.ne.s32.totalorder %s47, %s49
    %p53 = scmp.eq.s32.totalorder %s13, 0
    %p54 = por %p52, %p53
    %p55 = scmp.ne.s32.totalorder %s47, %s49
    %p56 = scmp.eq.s32.totalorder %s18, 1
    %p57 = por %p55, %p56
    %p58 = scmp.ne.s32.totalorder %s49, %s50
    %p59 = scmp.eq.s32.totalorder %s18, 0
    %p60 = por %p58, %p59
    %p61 = scmp.ne.s32.totalorder %s49, %s50
    %p62 = scmp.eq.s32.totalorder %s19, 1
    %p63 = por %p61, %p62
    %p65 = scmp.ne.s32.totalorder %s50, %s64
    %p66 = scmp.eq.s32.totalorder %s19, 0
    %p67 = por %p65, %p66
    %s69 = sadd.s32 %s68, 1
    %p72 = scmp.eq.s32.totalorder %s13, 1
    %p73 = scmp.ne.s32.totalorder %s68, %s70
    %p74 = scmp.eq.s32.totalorder %s13, 0
    %p75 = por %p73, %p74
    %p76 = scmp.ne.s32.totalorder %s68, %s70
    %p77 = scmp.eq.s32.totalorder %s18, 1
    %p78 = por %p76, %p77
    %p79 = scmp.ne.s32.totalorder %s70, %s71
    %p80 = scmp.eq.s32.totalorder %s18, 0
    %p81 = por %p79, %p80
    %p82 = scmp.ne.s32.totalorder %s70, %s71
    %p83 = scmp.eq.s32.totalorder %s19, 1
    %p84 = por %p82, %p83
    %p86 = scmp.ne.s32.totalorder %s71, %s85
    %p87 = scmp.eq.s32.totalorder %s19, 0
    %p88 = por %p86, %p87
    %s90 = sadd.s32 %s89, 1
    %p93 = scmp.eq.s32.totalorder %s13, 1
    %p94 = scmp.ne.s32.totalorder %s89, %s91
    %p95 = scmp.eq.s32.totalorder %s13, 0
    %p96 = por %p94, %p95
    %p97 = scmp.ne.s32.totalorder %s89, %s91
    %p98 = scmp.eq.s32.totalorder %s18, 1
    %p99 = por %p97, %p98
    %p100 = scmp.ne.s32.totalorder %s91, %s92
    %p101 = scmp.eq.s32.totalorder %s18, 0
    %p102 = por %p100, %p101
    %p103 = scmp.ne.s32.totalorder %s91, %s92
    %p104 = scmp.eq.s32.totalorder %s19, 1
    %p105 = por %p103, %p104
    %p107 = scmp.ne.s32.totalorder %s92, %s106
    %p108 = scmp.eq.s32.totalorder %s19, 0
    %p109 = por %p107, %p108
    %s111 = sadd.s32 %s110, 1
    %p114 = scmp.eq.s32.totalorder %s13, 1
    %p115 = scmp.ne.s32.totalorder %s110, %s112
    %p116 = scmp.eq.s32.totalorder %s13, 0
    %p117 = por %p115, %p116
    %p118 = scmp.ne.s32.totalorder %s110, %s112
    %p119 = scmp.eq.s32.totalorder %s18, 1
    %p120 = por %p118, %p119
    %p121 = scmp.ne.s32.totalorder %s112, %s113
    %p122 = scmp.eq.s32.totalorder %s18, 0
    %p123 = por %p121, %p122
    %p124 = scmp.ne.s32.totalorder %s112, %s113
    %p125 = scmp.eq.s32.totalorder %s19, 1
    %p126 = por %p124, %p125
    %p128 = scmp.ne.s32.totalorder %s113, %s127
    %p129 = scmp.eq.s32.totalorder %s19, 0
    %p130 = por %p128, %p129
    %s132 = sadd.s32 %s131, 1
    %p135 = scmp.eq.s32.totalorder %s13, 1
    %p136 = scmp.ne.s32.totalorder %s131, %s133
    %p137 = scmp.eq.s32.totalorder %s13, 0
    %p138 = por %p136, %p137
    %p139 = scmp.ne.s32.totalorder %s131, %s133
    %p140 = scmp.eq.s32.totalorder %s18, 1
    %p141 = por %p139, %p140
    %p142 = scmp.ne.s32.totalorder %s133, %s134
    %p143 = scmp.eq.s32.totalorder %s18, 0
    %p144 = por %p142, %p143
    %p145 = scmp.ne.s32.totalorder %s133, %s134
    %p146 = scmp.eq.s32.totalorder %s19, 1
    %p147 = por %p145, %p146
    %p149 = scmp.ne.s32.totalorder %s134, %s148
    %p150 = scmp.eq.s32.totalorder %s19, 0
    %p151 = por %p149, %p150
    %s153 = sadd.s32 %s152, 1
    %p156 = scmp.eq.s32.totalorder %s13, 1
    %p157 = scmp.ne.s32.totalorder %s152, %s154
    %p158 = scmp.eq.s32.totalorder %s13, 0
    %p159 = por %p157, %p158
    %p160 = scmp.ne.s32.totalorder %s152, %s154
    %p161 = scmp.eq.s32.totalorder %s18, 1
    %p162 = por %p160, %p161
    %p163 = scmp.ne.s32.totalorder %s154, %s155
    %p164 = scmp.eq.s32.totalorder %s18, 0
    %p165 = por %p163, %p164
    %p166 = scmp.ne.s32.totalorder %s154, %s155
    %p167 = scmp.eq.s32.totalorder %s19, 1
    %p168 = por %p166, %p167
    %p170 = scmp.ne.s32.totalorder %s155, %s169
    %p171 = scmp.eq.s32.totalorder %s19, 0
    %p172 = por %p170, %p171
    %s173 = ssub.s32 %s13, %s20
    %p174 = scmp.eq.s32.totalorder %s173, 0
    %s176 = sadd.s32 %s175, 1
    %s177 = scalar_select %p174, %s175, %s176
    %p180 = pneg %p174
    %p181 = scmp.eq.s32.totalorder %s13, 1
    %p182 = por %p180, %p181
    %p183 = scmp.ne.s32.totalorder %s175, %s178
    %p184 = scmp.eq.s32.totalorder %s13, 0
    %p185 = por %p183, %p184
    %p186 = scmp.ne.s32.totalorder %s175, %s178
    %p187 = scmp.eq.s32.totalorder %s18, 1
    %p188 = por %p186, %p187
    %p189 = scmp.ne.s32.totalorder %s178, %s179
    %p190 = scmp.eq.s32.totalorder %s18, 0
    %p191 = por %p189, %p190
    %p192 = scmp.ne.s32.totalorder %s178, %s179
    %p193 = scmp.eq.s32.totalorder %s19, 1
    %p194 = por %p192, %p193
    %p196 = scmp.ne.s32.totalorder %s179, %s195
    %p197 = scmp.eq.s32.totalorder %s19, 0
    %p198 = por %p196, %p197
    %p199 = scmp.le.s32.totalorder 1, %s13
    %p200 = scmp.lt.s32.totalorder %s13, 3
    %p201 = pnand %p199, %p200
    %p202 = pneg %p201
    // Predicated region
    $region9: #{cnn_baseline_forward.1} parent=5 // pred_check
      _
    $region10: #{cnn_baseline_forward.1} parent=5 // pred_check_branch
      %204 = sbr.rel (%p201) target = $region12
    $region11: #{cnn_baseline_forward.1} parent=5 // pred_region
      %s205 = ssub.s32 %s13, 1
      // Predicated region
      $region13: #{cnn_baseline_forward.1} parent=11 // pred_check
        %p206 = pneg %p60
      $region14: #{cnn_baseline_forward.1} parent=11 // pred_check_branch
        %208 = sbr.rel (%p206) target = $region16
      $region15: #{cnn_baseline_forward.1} parent=11 // pred_region
        _
      $region16: #{cnn_baseline_forward.1} parent=11 // pred_fallthru
        _
      // Predicated region
      $region17: #{cnn_baseline_forward.1} parent=11 // pred_check
        %p209 = pneg %p81
      $region18: #{cnn_baseline_forward.1} parent=11 // pred_check_branch
        %211 = sbr.rel (%p209) target = $region20
      $region19: #{cnn_baseline_forward.1} parent=11 // pred_region
        _
      $region20: #{cnn_baseline_forward.1} parent=11 // pred_fallthru
        _
      // Predicated region
      $region21: #{cnn_baseline_forward.1} parent=11 // pred_check
        %p212 = pneg %p102
      $region22: #{cnn_baseline_forward.1} parent=11 // pred_check_branch
        %214 = sbr.rel (%p212) target = $region24
      $region23: #{cnn_baseline_forward.1} parent=11 // pred_region
        _
      $region24: #{cnn_baseline_forward.1} parent=11 // pred_fallthru
        _
      // Predicated region
      $region25: #{cnn_baseline_forward.1} parent=11 // pred_check
        %p215 = pneg %p123
      $region26: #{cnn_baseline_forward.1} parent=11 // pred_check_branch
        %217 = sbr.rel (%p215) target = $region28
      $region27: #{cnn_baseline_forward.1} parent=11 // pred_region
        _
      $region28: #{cnn_baseline_forward.1} parent=11 // pred_fallthru
        _
      // Predicated region
      $region29: #{cnn_baseline_forward.1} parent=11 // pred_check
        %p218 = pneg %p144
      $region30: #{cnn_baseline_forward.1} parent=11 // pred_check_branch
        %220 = sbr.rel (%p218) target = $region32
      $region31: #{cnn_baseline_forward.1} parent=11 // pred_region
        _
      $region32: #{cnn_baseline_forward.1} parent=11 // pred_fallthru
        _
      // Predicated region
      $region33: #{cnn_baseline_forward.1} parent=11 // pred_check
        %p221 = pneg %p165
      $region34: #{cnn_baseline_forward.1} parent=11 // pred_check_branch
        %223 = sbr.rel (%p221) target = $region36
      $region35: #{cnn_baseline_forward.1} parent=11 // pred_region
        _
      $region36: #{cnn_baseline_forward.1} parent=11 // pred_fallthru
        _
    $region12: #{cnn_baseline_forward.1} parent=5 // pred_fallthru
      _
    %p224 = scmp.lt.s32.totalorder %s13, 2
    // Predicated region
    $region37: #{cnn_baseline_forward.1} parent=5 // pred_check
      %p225 = pneg %p224
    $region38: #{cnn_baseline_forward.1} parent=5 // pred_check_branch
      %227 = sbr.rel (%p225) target = $region40
    $region39: #{cnn_baseline_forward.1} parent=5 // pred_region
      // Predicated region
      $region41: #{cnn_baseline_forward.1} parent=39 // pred_check
        %p228 = pneg %p33
      $region42: #{cnn_baseline_forward.1} parent=39 // pred_check_branch
        %230 = sbr.rel (%p228) target = $region44
      $region43: #{cnn_baseline_forward.1} parent=39 // pred_region
        %s231 = smul.u32 16, %s13
        %p232 = scmp.lt.s32.totalorder %s231, 31
        %s233 = scalar_select %p232, %s231, 31
        %s234 = smul.addr %s233, 8
        %s235 = scalar_lea.vmem %s0, %s234
        %s236 = smul.u32 16, %s13
      $region44: #{cnn_baseline_forward.1} parent=39 // pred_fallthru
        _
    $region40: #{cnn_baseline_forward.1} parent=5 // pred_fallthru
      _
    %p237 = scmp.le.s32.totalorder 1, %s13
    %p238 = scmp.lt.s32.totalorder %s13, 3
    %p239 = pnand %p237, %p238
    %p240 = pneg %p239
    // Predicated region
    $region45: #{cnn_baseline_forward.1} parent=5 // pred_check
      _
    $region46: #{cnn_baseline_forward.1} parent=5 // pred_check_branch
      %242 = sbr.rel (%p239) target = $region48
    $region47: #{cnn_baseline_forward.1} parent=5 // pred_region
      %s243 = ssub.s32 %s13, 1
      %s244 = smul.u32 16, %s18
      %p245 = scmp.lt.s32.totalorder %s244, 31
      %s246 = scalar_select %p245, %s244, 31
      %s247 = smul.addr %s246, 8
      %s248 = scalar_lea.vmem %s0, %s247
      %p249 = pneg %p39
      %p250 = pneg %p36
      %p251 = pneg %p60
      %p252 = pneg %p57
      %p253 = pneg %p81
      %p254 = pneg %p78
      %p255 = pneg %p102
      %p256 = pneg %p99
      %p257 = pneg %p123
      %p258 = pneg %p120
      %p259 = pneg %p144
      %p260 = pneg %p141
      %p261 = pneg %p165
      %p262 = pneg %p162
      %p263 = pneg %p191
      %p264 = pneg %p188
      %p265 = scmp.lt.s32.totalorder %s18, 1
      %s266 = scalar_select %p265, %s18, 1
      %s267 = smul.addr %s266, 8
      %s268 = scalar_lea.vmem %s7, %s267
      %s269 = smul.u32 16, %s18
      %p270 = scmp.lt.s32.totalorder %s269, 31
      %s271 = scalar_select %p270, %s269, 31
      %s272 = smul.addr %s271, 8
      %s273 = scalar_lea.vmem %s0, %s272
      %s274 = smul.u32 16, %s18
      %p275 = scmp.lt.s32.totalorder %s18, 1
      %s276 = scalar_select %p275, %s18, 1
      %s277 = smul.addr %s276, 8
      %s278 = scalar_lea.vmem %s7, %s277
      %v280 = vld [vmem:[%s273] sm:$0xff]
      %v281 = vld [vmem:[%s273 + $0x8] sm:$0xff]
      %v282 = vld [vmem:[%s273 + $0x10] sm:$0xff]
      %v283 = vld [vmem:[%s273 + $0x18] sm:$0xff]
      %v284 = vld [vmem:[%s273 + $0x20] sm:$0xff]
      %v285 = vld [vmem:[%s273 + $0x28] sm:$0xff]
      %v286 = vld [vmem:[%s273 + $0x30] sm:$0xff]
      %v287 = vld [vmem:[%s273 + $0x38] sm:$0xff]
      %v288 = vld [vmem:[%s273 + $0x40] sm:$0xff]
      %v289 = vld [vmem:[%s273 + $0x48] sm:$0xff]
      %v290 = vld [vmem:[%s273 + $0x50] sm:$0xff]
      %v291 = vld [vmem:[%s273 + $0x58] sm:$0xff]
      %v292 = vld [vmem:[%s273 + $0x60] sm:$0xff]
      %v293 = vld [vmem:[%s273 + $0x68] sm:$0xff]
      %v294 = vld [vmem:[%s273 + $0x70] sm:$0xff]
      %v295 = vld [vmem:[%s273 + $0x78] sm:$0xff]
      %v296 = vlaneseq
      %v297 = vand.u32 %v296, 127
      %298 = vset.pattern.permute.xlu0 0
      %299 = vperm.xlu0 %298, %v280
      %v300 = vpop.permute.xlu0 %299
      %301 = vset.pattern.permute.xlu0 0
      %302 = vperm.xlu0 %301, %v281
      %v303 = vpop.permute.xlu0 %302
      %304 = vset.pattern.permute.xlu0 0
      %305 = vperm.xlu0 %304, %v282
      %v306 = vpop.permute.xlu0 %305
      %307 = vset.pattern.permute.xlu0 0
      %308 = vperm.xlu0 %307, %v283
      %v309 = vpop.permute.xlu0 %308
      %310 = vset.pattern.permute.xlu0 0
      %311 = vperm.xlu0 %310, %v284
      %v312 = vpop.permute.xlu0 %311
      %313 = vset.pattern.permute.xlu0 0
      %314 = vperm.xlu0 %313, %v285
      %v315 = vpop.permute.xlu0 %314
      %316 = vset.pattern.permute.xlu0 0
      %317 = vperm.xlu0 %316, %v286
      %v318 = vpop.permute.xlu0 %317
      %319 = vset.pattern.permute.xlu0 0
      %320 = vperm.xlu0 %319, %v287
      %v321 = vpop.permute.xlu0 %320
      %322 = vset.pattern.permute.xlu0 0
      %323 = vperm.xlu0 %322, %v288
      %v324 = vpop.permute.xlu0 %323
      %325 = vset.pattern.permute.xlu0 0
      %326 = vperm.xlu0 %325, %v289
      %v327 = vpop.permute.xlu0 %326
      %328 = vset.pattern.permute.xlu0 0
      %329 = vperm.xlu0 %328, %v290
      %v330 = vpop.permute.xlu0 %329
      %331 = vset.pattern.permute.xlu0 0
      %332 = vperm.xlu0 %331, %v291
      %v333 = vpop.permute.xlu0 %332
      %334 = vset.pattern.permute.xlu0 0
      %335 = vperm.xlu0 %334, %v292
      %v336 = vpop.permute.xlu0 %335
      %337 = vset.pattern.permute.xlu0 0
      %338 = vperm.xlu0 %337, %v293
      %v339 = vpop.permute.xlu0 %338
      %340 = vset.pattern.permute.xlu0 0
      %341 = vperm.xlu0 %340, %v294
      %v342 = vpop.permute.xlu0 %341
      %343 = vset.pattern.permute.xlu0 0
      %344 = vperm.xlu0 %343, %v295
      %v345 = vpop.permute.xlu0 %344
      %vm346 = vcmp.eq.s32.totalorder %v297, %v300
      %vm347 = vcmp.eq.s32.totalorder %v297, %v303
      %vm348 = vcmp.eq.s32.totalorder %v297, %v306
      %vm349 = vcmp.eq.s32.totalorder %v297, %v309
      %vm350 = vcmp.eq.s32.totalorder %v297, %v312
      %vm351 = vcmp.eq.s32.totalorder %v297, %v315
      %vm352 = vcmp.eq.s32.totalorder %v297, %v318
      %vm353 = vcmp.eq.s32.totalorder %v297, %v321
      %vm354 = vcmp.eq.s32.totalorder %v297, %v324
      %vm355 = vcmp.eq.s32.totalorder %v297, %v327
      %vm356 = vcmp.eq.s32.totalorder %v297, %v330
      %vm357 = vcmp.eq.s32.totalorder %v297, %v333
      %vm358 = vcmp.eq.s32.totalorder %v297, %v336
      %vm359 = vcmp.eq.s32.totalorder %v297, %v339
      %vm360 = vcmp.eq.s32.totalorder %v297, %v342
      %vm361 = vcmp.eq.s32.totalorder %v297, %v345
      %v362 = vsel %vm346, 1, 0
      %v363 = vsel %vm347, 1, 0
      %v364 = vsel %vm348, 1, 0
      %v365 = vsel %vm349, 1, 0
      %v366 = vsel %vm350, 1, 0
      %v367 = vsel %vm351, 1, 0
      %v368 = vsel %vm352, 1, 0
      %v369 = vsel %vm353, 1, 0
      %v370 = vsel %vm354, 1, 0
      %v371 = vsel %vm355, 1, 0
      %v372 = vsel %vm356, 1, 0
      %v373 = vsel %vm357, 1, 0
      %v374 = vsel %vm358, 1, 0
      %v375 = vsel %vm359, 1, 0
      %v376 = vsel %vm360, 1, 0
      %v377 = vsel %vm361, 1, 0
      %v378 = vcvt.s32.f32 %v362
      %v379 = vcvt.s32.f32 %v363
      %v380 = vcvt.s32.f32 %v364
      %v381 = vcvt.s32.f32 %v365
      %v382 = vcvt.s32.f32 %v366
      %v383 = vcvt.s32.f32 %v367
      %v384 = vcvt.s32.f32 %v368
      %v385 = vcvt.s32.f32 %v369
      %v386 = vcvt.s32.f32 %v370
      %v387 = vcvt.s32.f32 %v371
      %v388 = vcvt.s32.f32 %v372
      %v389 = vcvt.s32.f32 %v373
      %v390 = vcvt.s32.f32 %v374
      %v391 = vcvt.s32.f32 %v375
      %v392 = vcvt.s32.f32 %v376
      %v393 = vcvt.s32.f32 %v377
      %v394 = vpack.c.bf16 %v379, %v378
      %v395 = vpack.c.bf16 %v381, %v380
      %v396 = vpack.c.bf16 %v383, %v382
      %v397 = vpack.c.bf16 %v385, %v384
      %v398 = vpack.c.bf16 %v387, %v386
      %v399 = vpack.c.bf16 %v389, %v388
      %v400 = vpack.c.bf16 %v391, %v390
      %v401 = vpack.c.bf16 %v393, %v392
      %v402 = vld [vmem:[%s1] sm:$0xf]
      %v403 = vld [vmem:[%s1 + $0x4] sm:$0xf]
      %v404 = vld [vmem:[%s1 + $0x8] sm:$0xf]
      %v405 = vld [vmem:[%s1 + $0xc] sm:$0xf]
      %v406 = vld [vmem:[%s1 + $0x10] sm:$0xf]
      %v407 = vld [vmem:[%s1 + $0x14] sm:$0xf]
      %v408 = vld [vmem:[%s1 + $0x18] sm:$0x1]
      %v416 = vunpack.c.l.b16 %v402
      %v417 = vunpack.c.l.b16 %v403
      %v418 = vunpack.c.l.b16 %v404
      %v419 = vunpack.c.l.b16 %v405
      %v420 = vunpack.c.l.b16 %v406
      %v421 = vunpack.c.l.b16 %v407
      %v422 = vunpack.c.l.b16 %v408
      %v423 = vpack.c.b16 %v417, %v416
      %v424 = vpack.c.b16 %v419, %v418
      %v425 = vpack.c.b16 %v421, %v420
      %v426 = vpack.c.b16 %v422, %v422
      %vm430 = vcmask 408576
      %v432 = vsel %vm430, %v394, 0
      %v435 = vsel %vm430, %v395, 0
      %v438 = vsel %vm430, %v396, 0
      %v441 = vsel %vm430, %v397, 0
      %v444 = vsel %vm430, %v398, 0
      %v447 = vsel %vm430, %v399, 0
      %v450 = vsel %vm430, %v400, 0
      %v453 = vsel %vm430, %v401, 0
      %vm455 = vcmask 1040384
      %v457 = vsel %vm455, %v426, 0
      %459 = vmatprep.subr.bf16.mxu0 0
      %460 = vmatpush1.bf16.msra.mxu0 %v423
      %461 = vmatprep.subr.bf16.mxu0 0
      %462 = vmatpush1.bf16.msra.mxu0 %v424
      %463 = vmatprep.subr.bf16.mxu0 0
      %464 = vmatpush1.bf16.msra.mxu0 %v425
      %465 = vmatprep.subr.bf16.mxu0 0
      %466 = vmatpush1.bf16.msra.mxu0 %v457
      %467 = vmatprep.subr.bf16.mxu0 0
      %468 = vmatpush1.bf16.msra.mxu0 0
      %469 = vmatprep.subr.bf16.mxu0 0
      %470 = vmatpush1.bf16.msra.mxu0 0
      %471 = vmatprep.subr.bf16.mxu0 0
      %472 = vmatpush1.bf16.msra.mxu0 0
      %473 = vmatprep.subr.bf16.mxu0 0
      %474 = vmatpush1.bf16.msra.mxu0 0
      %475 = vmatprep.subr.bf16.mxu0 0
      %476 = vmatpush1.bf16.msra.mxu0 0
      %477 = vmatprep.subr.bf16.mxu0 0
      %478 = vmatpush1.bf16.msra.mxu0 0
      %479 = vmatprep.subr.bf16.mxu0 0
      %480 = vmatpush1.bf16.msra.mxu0 0
      %481 = vmatprep.subr.bf16.mxu0 0
      %482 = vmatpush1.bf16.msra.mxu0 0
      %483 = vmatprep.subr.bf16.mxu0 0
      %484 = vmatpush1.bf16.msra.mxu0 0
      %485 = vmatprep.subr.bf16.mxu0 0
      %486 = vmatpush1.bf16.msra.mxu0 0
      %487 = vmatprep.subr.bf16.mxu0 0
      %488 = vmatpush1.bf16.msra.mxu0 0
      %489 = vmatprep.subr.bf16.mxu0 0
      %490 = vmatpush1.bf16.msra.mxu0 0
      %491 = vmatprep.mubr.bf16.mxu0 0
      %492 = vmatmul.mubr.bf16.gmra.mrb[0].mxu0 %v432
      %v493 = vpop.f32.mrb[0].mxu0
      %v494 = vadd.f32 0.0, %v493
      %v495 = vpop.f32.mrb[0].mxu0
      %v496 = vpop.f32.mrb[0].mxu0
      %v497 = vadd.f32 0.0, %v496
      %v498 = vpop.f32.mrb[0].mxu0
      %499 = vmatprep.mubr.bf16.mxu0 0
      %500 = vmatmul.mubr.bf16.gmra.mrb[0].mxu0 %v435
      %v501 = vpop.f32.mrb[0].mxu0
      %v502 = vadd.f32 0.0, %v501
      %v503 = vpop.f32.mrb[0].mxu0
      %v504 = vpop.f32.mrb[0].mxu0
      %v505 = vadd.f32 0.0, %v504
      %v506 = vpop.f32.mrb[0].mxu0
      %507 = vmatprep.mubr.bf16.mxu0 0
      %508 = vmatmul.mubr.bf16.gmra.mrb[0].mxu0 %v438
      %v509 = vpop.f32.mrb[0].mxu0
      %v510 = vadd.f32 0.0, %v509
      %v511 = vpop.f32.mrb[0].mxu0
      %v512 = vpop.f32.mrb[0].mxu0
      %v513 = vadd.f32 0.0, %v512
      %v514 = vpop.f32.mrb[0].mxu0
      %515 = vmatprep.mubr.bf16.mxu0 0
      %516 = vmatmul.mubr.bf16.gmra.mrb[0].mxu0 %v441
      %v517 = vpop.f32.mrb[0].mxu0
      %v518 = vadd.f32 0.0, %v517
      %v519 = vpop.f32.mrb[0].mxu0
      %v520 = vpop.f32.mrb[0].mxu0
      %v521 = vadd.f32 0.0, %v520
      %v522 = vpop.f32.mrb[0].mxu0
      %523 = vmatprep.mubr.bf16.mxu0 0
      %524 = vmatmul.mubr.bf16.gmra.mrb[0].mxu0 %v444
      %v525 = vpop.f32.mrb[0].mxu0
      %v526 = vadd.f32 0.0, %v525
      %v527 = vpop.f32.mrb[0].mxu0
      %v528 = vpop.f32.mrb[0].mxu0
      %v529 = vadd.f32 0.0, %v528
      %v530 = vpop.f32.mrb[0].mxu0
      %531 = vmatprep.mubr.bf16.mxu0 0
      %532 = vmatmul.mubr.bf16.gmra.mrb[0].mxu0 %v447
      %v533 = vpop.f32.mrb[0].mxu0
      %v534 = vadd.f32 0.0, %v533
      %v535 = vpop.f32.mrb[0].mxu0
      %v536 = vpop.f32.mrb[0].mxu0
      %v537 = vadd.f32 0.0, %v536
      %v538 = vpop.f32.mrb[0].mxu0
      %539 = vmatprep.mubr.bf16.mxu0 0
      %540 = vmatmul.mubr.bf16.gmra.mrb[0].mxu0 %v450
      %v541 = vpop.f32.mrb[0].mxu0
      %v542 = vadd.f32 0.0, %v541
      %v543 = vpop.f32.mrb[0].mxu0
      %v544 = vpop.f32.mrb[0].mxu0
      %v545 = vadd.f32 0.0, %v544
      %v546 = vpop.f32.mrb[0].mxu0
      %547 = vmatprep.mubr.bf16.mxu0 0
      %548 = vmatmul.mubr.bf16.gmra.mrb[0].mxu0 %v453
      %v549 = vpop.f32.mrb[0].mxu0
      %v550 = vadd.f32 0.0, %v549
      %v551 = vpop.f32.mrb[0].mxu0
      %v552 = vpop.f32.mrb[0].mxu0
      %v553 = vadd.f32 0.0, %v552
      %v554 = vpop.f32.mrb[0].mxu0
      %555 = vdwg.mxu0
      %v556 = vpack.c.bf16 %v497, %v494
      %v557 = vpack.c.bf16 %v505, %v502
      %v558 = vpack.c.bf16 %v513, %v510
      %v559 = vpack.c.bf16 %v521, %v518
      %v560 = vpack.c.bf16 %v529, %v526
      %v561 = vpack.c.bf16 %v537, %v534
      %v562 = vpack.c.bf16 %v545, %v542
      %v563 = vpack.c.bf16 %v553, %v550
      %v564 = vld [vmem:[%s2] sm:$0xff]
      %v565 = vld [vmem:[%s2 + $0x8] sm:$0xf]
      %v566 = vld [vmem:[%s2 + $0xc] sm:$0xff]
      %v567 = vld [vmem:[%s2 + $0x14] sm:$0xf]
      %v568 = vld [vmem:[%s2 + $0x18] sm:$0xff]
      %v569 = vld [vmem:[%s2 + $0x20] sm:$0xf]
      %v570 = vld [vmem:[%s2 + $0x24] sm:$0xff]
      %v571 = vld [vmem:[%s2 + $0x2c] sm:$0xf]
      %v580 = vunpack.c.l.b16 %v564
      %v581 = vunpack.c.h.b16 %v564
      %v582 = vunpack.c.l.b16 %v565
      %v583 = vunpack.c.l.b16 %v566
      %v584 = vunpack.c.h.b16 %v566
      %v585 = vunpack.c.l.b16 %v567
      %v586 = vunpack.c.l.b16 %v568
      %v587 = vunpack.c.h.b16 %v568
      %v588 = vunpack.c.l.b16 %v569
      %v589 = vunpack.c.l.b16 %v570
      %v590 = vunpack.c.h.b16 %v570
      %v591 = vunpack.c.l.b16 %v571
      %v592 = vpack.c.b16 %v583, %v580
      %v593 = vpack.c.b16 %v584, %v581
      %v594 = vpack.c.b16 %v585, %v582
      %v595 = vpack.c.b16 %v589, %v586
      %v596 = vpack.c.b16 %v590, %v587
      %v597 = vpack.c.b16 %v591, %v588
      %vm604 = vcmask 261120
      %v606 = vsel %vm604, %v556, 0
      %v609 = vsel %vm604, %v557, 0
      %v612 = vsel %vm604, %v558, 0
      %v615 = vsel %vm604, %v559, 0
      %v618 = vsel %vm604, %v560, 0
      %v621 = vsel %vm604, %v561, 0
      %v624 = vsel %vm604, %v562, 0
      %v627 = vsel %vm604, %v563, 0
      %629 = vmatprep.subr.bf16.mxu0 %v593
      %630 = vmatpush1.bf16.msra.mxu0 %v592
      %631 = vmatprep.subr.bf16.mxu0 %v596
      %632 = vmatpush1.bf16.msra.mxu0 %v595
      %633 = vmatprep.subr.bf16.mxu0 0
      %634 = vmatpush1.bf16.msra.mxu0 0
      %635 = vmatprep.subr.bf16.mxu0 0
      %636 = vmatpush1.bf16.msra.mxu0 0
      %637 = vmatprep.subr.bf16.mxu0 0
      %638 = vmatpush1.bf16.msra.mxu0 0
      %639 = vmatprep.subr.bf16.mxu0 0
      %640 = vmatpush1.bf16.msra.mxu0 0
      %641 = vmatprep.subr.bf16.mxu0 0
      %642 = vmatpush1.bf16.msra.mxu0 0
      %643 = vmatprep.subr.bf16.mxu0 0
      %644 = vmatpush1.bf16.msra.mxu0 0
      %645 = vmatprep.subr.bf16.mxu0 0
      %646 = vmatpush1.bf16.msra.mxu0 0
      %647 = vmatprep.subr.bf16.mxu0 0
      %648 = vmatpush1.bf16.msra.mxu0 0
      %649 = vmatprep.subr.bf16.mxu0 0
      %650 = vmatpush1.bf16.msra.mxu0 0
      %651 = vmatprep.subr.bf16.mxu0 0
      %652 = vmatpush1.bf16.msra.mxu0 0
      %653 = vmatprep.subr.bf16.mxu0 0
      %654 = vmatpush1.bf16.msra.mxu0 0
      %655 = vmatprep.subr.bf16.mxu0 0
      %656 = vmatpush1.bf16.msra.mxu0 0
      %657 = vmatprep.subr.bf16.mxu0 0
      %658 = vmatpush1.bf16.msra.mxu0 0
      %659 = vmatprep.subr.bf16.mxu0 0
      %660 = vmatpush1.bf16.msra.mxu0 0
      %661 = vmatprep.mubr.bf16.mxu0 0
      %662 = vmatmul.mubr.bf16.gmra.mrb[0].mxu0 %v606
      %v663 = vpop.f32.mrb[0].mxu0
      %v664 = vadd.f32 0.0, %v663
      %v665 = vpop.f32.mrb[0].mxu0
      %v666 = vadd.f32 0.0, %v665
      %v667 = vpop.f32.mrb[0].mxu0
      %v668 = vadd.f32 0.0, %v667
      %v669 = vpop.f32.mrb[0].mxu0
      %v670 = vadd.f32 0.0, %v669
      %671 = vmatprep.mubr.bf16.mxu0 0
      %672 = vmatmul.mubr.bf16.gmra.mrb[0].mxu0 %v609
      %v673 = vpop.f32.mrb[0].mxu0
      %v674 = vadd.f32 0.0, %v673
      %v675 = vpop.f32.mrb[0].mxu0
      %v676 = vadd.f32 0.0, %v675
      %v677 = vpop.f32.mrb[0].mxu0
      %v678 = vadd.f32 0.0, %v677
      %v679 = vpop.f32.mrb[0].mxu0
      %v680 = vadd.f32 0.0, %v679
      %681 = vmatprep.mubr.bf16.mxu0 0
      %682 = vmatmul.mubr.bf16.gmra.mrb[0].mxu0 %v612
      %v683 = vpop.f32.mrb[0].mxu0
      %v684 = vadd.f32 0.0, %v683
      %v685 = vpop.f32.mrb[0].mxu0
      %v686 = vadd.f32 0.0, %v685
      %v687 = vpop.f32.mrb[0].mxu0
      %v688 = vadd.f32 0.0, %v687
      %v689 = vpop.f32.mrb[0].mxu0
      %v690 = vadd.f32 0.0, %v689
      %691 = vmatprep.mubr.bf16.mxu0 0
      %692 = vmatmul.mubr.bf16.gmra.mrb[0].mxu0 %v615
      %v693 = vpop.f32.mrb[0].mxu0
      %v694 = vadd.f32 0.0, %v693
      %v695 = vpop.f32.mrb[0].mxu0
      %v696 = vadd.f32 0.0, %v695
      %v697 = vpop.f32.mrb[0].mxu0
      %v698 = vadd.f32 0.0, %v697
      %v699 = vpop.f32.mrb[0].mxu0
      %v700 = vadd.f32 0.0, %v699
      %701 = vmatprep.mubr.bf16.mxu0 0
      %702 = vmatmul.mubr.bf16.gmra.mrb[0].mxu0 %v618
      %v703 = vpop.f32.mrb[0].mxu0
      %v704 = vadd.f32 0.0, %v703
      %v705 = vpop.f32.mrb[0].mxu0
      %v706 = vadd.f32 0.0, %v705
      %v707 = vpop.f32.mrb[0].mxu0
      %v708 = vadd.f32 0.0, %v707
      %v709 = vpop.f32.mrb[0].mxu0
      %v710 = vadd.f32 0.0, %v709
      %711 = vmatprep.mubr.bf16.mxu0 0
      %712 = vmatmul.mubr.bf16.gmra.mrb[0].mxu0 %v621
      %v713 = vpop.f32.mrb[0].mxu0
      %v714 = vadd.f32 0.0, %v713
      %v715 = vpop.f32.mrb[0].mxu0
      %v716 = vadd.f32 0.0, %v715
      %v717 = vpop.f32.mrb[0].mxu0
      %v718 = vadd.f32 0.0, %v717
      %v719 = vpop.f32.mrb[0].mxu0
      %v720 = vadd.f32 0.0, %v719
      %721 = vmatprep.mubr.bf16.mxu0 0
      %722 = vmatmul.mubr.bf16.gmra.mrb[0].mxu0 %v624
      %v723 = vpop.f32.mrb[0].mxu0
      %v724 = vadd.f32 0.0, %v723
      %v725 = vpop.f32.mrb[0].mxu0
      %v726 = vadd.f32 0.0, %v725
      %v727 = vpop.f32.mrb[0].mxu0
      %v728 = vadd.f32 0.0, %v727
      %v729 = vpop.f32.mrb[0].mxu0
      %v730 = vadd.f32 0.0, %v729
      %731 = vmatprep.mubr.bf16.mxu0 0
      %732 = vmatmul.mubr.bf16.gmra.mrb[0].mxu0 %v627
      %v733 = vpop.f32.mrb[0].mxu0
      %v734 = vadd.f32 0.0, %v733
      %v735 = vpop.f32.mrb[0].mxu0
      %v736 = vadd.f32 0.0, %v735
      %v737 = vpop.f32.mrb[0].mxu0
      %v738 = vadd.f32 0.0, %v737
      %v739 = vpop.f32.mrb[0].mxu0
      %v740 = vadd.f32 0.0, %v739
      %741 = vdwg.mxu0
      %742 = vmatprep.subr.bf16.mxu0 0
      %743 = vmatpush1.bf16.msra.mxu0 %v594
      %744 = vmatprep.subr.bf16.mxu0 0
      %745 = vmatpush1.bf16.msra.mxu0 %v597
      %746 = vmatprep.subr.bf16.mxu0 0
      %747 = vmatpush1.bf16.msra.mxu0 0
      %748 = vmatprep.subr.bf16.mxu0 0
      %749 = vmatpush1.bf16.msra.mxu0 0
      %750 = vmatprep.subr.bf16.mxu0 0
      %751 = vmatpush1.bf16.msra.mxu0 0
      %752 = vmatprep.subr.bf16.mxu0 0
      %753 = vmatpush1.bf16.msra.mxu0 0
      %754 = vmatprep.subr.bf16.mxu0 0
      %755 = vmatpush1.bf16.msra.mxu0 0
      %756 = vmatprep.subr.bf16.mxu0 0
      %757 = vmatpush1.bf16.msra.mxu0 0
      %758 = vmatprep.subr.bf16.mxu0 0
      %759 = vmatpush1.bf16.msra.mxu0 0
      %760 = vmatprep.subr.bf16.mxu0 0
      %761 = vmatpush1.bf16.msra.mxu0 0
      %762 = vmatprep.subr.bf16.mxu0 0
      %763 = vmatpush1.bf16.msra.mxu0 0
      %764 = vmatprep.subr.bf16.mxu0 0
      %765 = vmatpush1.bf16.msra.mxu0 0
      %766 = vmatprep.subr.bf16.mxu0 0
      %767 = vmatpush1.bf16.msra.mxu0 0
      %768 = vmatprep.subr.bf16.mxu0 0
      %769 = vmatpush1.bf16.msra.mxu0 0
      %770 = vmatprep.subr.bf16.mxu0 0
      %771 = vmatpush1.bf16.msra.mxu0 0
      %772 = vmatprep.subr.bf16.mxu0 0
      %773 = vmatpush1.bf16.msra.mxu0 0
      %774 = vmatprep.mubr.bf16.mxu0 0
      %775 = vmatmul.mubr.bf16.gmra.mrb[0].mxu0 %v606
      %v776 = vpop.f32.mrb[0].mxu0
      %v777 = vadd.f32 0.0, %v776
      %v778 = vpop.f32.mrb[0].mxu0
      %v779 = vpop.f32.mrb[0].mxu0
      %v780 = vadd.f32 0.0, %v779
      %v781 = vpop.f32.mrb[0].mxu0
      %782 = vmatprep.mubr.bf16.mxu0 0
      %783 = vmatmul.mubr.bf16.gmra.mrb[0].mxu0 %v609
      %v784 = vpop.f32.mrb[0].mxu0
      %v785 = vadd.f32 0.0, %v784
      %v786 = vpop.f32.mrb[0].mxu0
      %v787 = vpop.f32.mrb[0].mxu0
      %v788 = vadd.f32 0.0, %v787
      %v789 = vpop.f32.mrb[0].mxu0
      %790 = vmatprep.mubr.bf16.mxu0 0
      %791 = vmatmul.mubr.bf16.gmra.mrb[0].mxu0 %v612
      %v792 = vpop.f32.mrb[0].mxu0
      %v793 = vadd.f32 0.0, %v792
      %v794 = vpop.f32.mrb[0].mxu0
      %v795 = vpop.f32.mrb[0].mxu0
      %v796 = vadd.f32 0.0, %v795
      %v797 = vpop.f32.mrb[0].mxu0
      %798 = vmatprep.mubr.bf16.mxu0 0
      %799 = vmatmul.mubr.bf16.gmra.mrb[0].mxu0 %v615
      %v800 = vpop.f32.mrb[0].mxu0
      %v801 = vadd.f32 0.0, %v800
      %v802 = vpop.f32.mrb[0].mxu0
      %v803 = vpop.f32.mrb[0].mxu0
      %v804 = vadd.f32 0.0, %v803
      %v805 = vpop.f32.mrb[0].mxu0
      %806 = vmatprep.mubr.bf16.mxu0 0
      %807 = vmatmul.mubr.bf16.gmra.mrb[0].mxu0 %v618
      %v808 = vpop.f32.mrb[0].mxu0
      %v809 = vadd.f32 0.0, %v808
      %v810 = vpop.f32.mrb[0].mxu0
      %v811 = vpop.f32.mrb[0].mxu0
      %v812 = vadd.f32 0.0, %v811
      %v813 = vpop.f32.mrb[0].mxu0
      %814 = vmatprep.mubr.bf16.mxu0 0
      %815 = vmatmul.mubr.bf16.gmra.mrb[0].mxu0 %v621
      %v816 = vpop.f32.mrb[0].mxu0
      %v817 = vadd.f32 0.0, %v816
      %v818 = vpop.f32.mrb[0].mxu0
      %v819 = vpop.f32.mrb[0].mxu0
      %v820 = vadd.f32 0.0, %v819
      %v821 = vpop.f32.mrb[0].mxu0
      %822 = vmatprep.mubr.bf16.mxu0 0
      %823 = vmatmul.mubr.bf16.gmra.mrb[0].mxu0 %v624
      %v824 = vpop.f32.mrb[0].mxu0
      %v825 = vadd.f32 0.0, %v824
      %v826 = vpop.f32.mrb[0].mxu0
      %v827 = vpop.f32.mrb[0].mxu0
      %v828 = vadd.f32 0.0, %v827
      %v829 = vpop.f32.mrb[0].mxu0
      %830 = vmatprep.mubr.bf16.mxu0 0
      %831 = vmatmul.mubr.bf16.gmra.mrb[0].mxu0 %v627
      %v832 = vpop.f32.mrb[0].mxu0
      %v833 = vadd.f32 0.0, %v832
      %v834 = vpop.f32.mrb[0].mxu0
      %v835 = vpop.f32.mrb[0].mxu0
      %v836 = vadd.f32 0.0, %v835
      %v837 = vpop.f32.mrb[0].mxu0
      %838 = vdwg.mxu0
      %v839 = vrot.slane %v666, 1
      %v840 = vrot.slane %v670, 1
      %v841 = vrot.slane %v676, 1
      %v842 = vrot.slane %v680, 1
      %v843 = vrot.slane %v686, 1
      %v844 = vrot.slane %v690, 1
      %v845 = vrot.slane %v696, 1
      %v846 = vrot.slane %v700, 1
      %v847 = vrot.slane %v706, 1
      %v848 = vrot.slane %v710, 1
      %v849 = vrot.slane %v716, 1
      %v850 = vrot.slane %v720, 1
      %v851 = vrot.slane %v726, 1
      %v852 = vrot.slane %v730, 1
      %v853 = vrot.slane %v736, 1
      %v854 = vrot.slane %v740, 1
      %v855 = vlaneseq
      %v856 = vshrl.u32 %v855, 7
      %vm857 = vcmp.lt.s32.totalorder %v856, 7
      %v858 = vsel %vm857, %v853, %v854
      %v859 = vsel %vm857, %v852, %v853
      %v860 = vsel %vm857, %v851, %v852
      %v861 = vsel %vm857, %v850, %v851
      %v862 = vsel %vm857, %v849, %v850
      %v863 = vsel %vm857, %v848, %v849
      %v864 = vsel %vm857, %v847, %v848
      %v865 = vsel %vm857, %v846, %v847
      %v866 = vsel %vm857, %v845, %v846
      %v867 = vsel %vm857, %v844, %v845
      %v868 = vsel %vm857, %v843, %v844
      %v869 = vsel %vm857, %v842, %v843
      %v870 = vsel %vm857, %v841, %v842
      %v871 = vsel %vm857, %v840, %v841
      %v872 = vsel %vm857, %v839, %v840
      %v873 = vsel %vm857, %v854, %v839
      %v874 = vadd.f32 %v664, %v872
      %v875 = vadd.f32 %v668, %v871
      %v876 = vadd.f32 %v674, %v870
      %v877 = vadd.f32 %v678, %v869
      %v878 = vadd.f32 %v684, %v868
      %v879 = vadd.f32 %v688, %v867
      %v880 = vadd.f32 %v694, %v866
      %v881 = vadd.f32 %v698, %v865
      %v882 = vadd.f32 %v704, %v864
      %v883 = vadd.f32 %v708, %v863
      %v884 = vadd.f32 %v714, %v862
      %v885 = vadd.f32 %v718, %v861
      %v886 = vadd.f32 %v724, %v860
      %v887 = vadd.f32 %v728, %v859
      %v888 = vadd.f32 %v734, %v858
      %v889 = vadd.f32 %v738, %v873
      %v890 = vrot.slane %v777, 2
      %v891 = vrot.slane %v780, 2
      %v892 = vrot.slane %v785, 2
      %v893 = vrot.slane %v788, 2
      %v894 = vrot.slane %v793, 2
      %v895 = vrot.slane %v796, 2
      %v896 = vrot.slane %v801, 2
      %v897 = vrot.slane %v804, 2
      %v898 = vrot.slane %v809, 2
      %v899 = vrot.slane %v812, 2
      %v900 = vrot.slane %v817, 2
      %v901 = vrot.slane %v820, 2
      %v902 = vrot.slane %v825, 2
      %v903 = vrot.slane %v828, 2
      %v904 = vrot.slane %v833, 2
      %v905 = vrot.slane %v836, 2
      %vm906 = vcmp.lt.s32.totalorder %v856, 6
      %v907 = vsel %vm906, %v904, %v905
      %v908 = vsel %vm906, %v903, %v904
      %v909 = vsel %vm906, %v902, %v903
      %v910 = vsel %vm906, %v901, %v902
      %v911 = vsel %vm906, %v900, %v901
      %v912 = vsel %vm906, %v899, %v900
      %v913 = vsel %vm906, %v898, %v899
      %v914 = vsel %vm906, %v897, %v898
      %v915 = vsel %vm906, %v896, %v897
      %v916 = vsel %vm906, %v895, %v896
      %v917 = vsel %vm906, %v894, %v895
      %v918 = vsel %vm906, %v893, %v894
      %v919 = vsel %vm906, %v892, %v893
      %v920 = vsel %vm906, %v891, %v892
      %v921 = vsel %vm906, %v890, %v891
      %v922 = vsel %vm906, %v905, %v890
      %v923 = vadd.f32 %v874, %v921
      %v924 = vadd.f32 %v875, %v920
      %v925 = vadd.f32 %v876, %v919
      %v926 = vadd.f32 %v877, %v918
      %v927 = vadd.f32 %v878, %v917
      %v928 = vadd.f32 %v879, %v916
      %v929 = vadd.f32 %v880, %v915
      %v930 = vadd.f32 %v881, %v914
      %v931 = vadd.f32 %v882, %v913
      %v932 = vadd.f32 %v883, %v912
      %v933 = vadd.f32 %v884, %v911
      %v934 = vadd.f32 %v885, %v910
      %v935 = vadd.f32 %v886, %v909
      %v936 = vadd.f32 %v887, %v908
      %v937 = vadd.f32 %v888, %v907
      %v938 = vadd.f32 %v889, %v922
      %v939 = vld [vmem:[%s3] sm:$0x1]
      %v941 = vlaneseq
      %v942 = vshrl.u32 %v941, 7
      %v943 = vsub.s32 0, %v942
      %v944 = vrot.slane %v939, %v943
      %v946 = vadd.f32 %v923, %v944
      %v947 = vadd.f32 %v924, %v944
      %v948 = vadd.f32 %v925, %v944
      %v949 = vadd.f32 %v926, %v944
      %v950 = vadd.f32 %v927, %v944
      %v951 = vadd.f32 %v928, %v944
      %v952 = vadd.f32 %v929, %v944
      %v953 = vadd.f32 %v930, %v944
      %v954 = vadd.f32 %v931, %v944
      %v955 = vadd.f32 %v932, %v944
      %v956 = vadd.f32 %v933, %v944
      %v957 = vadd.f32 %v934, %v944
      %v958 = vadd.f32 %v935, %v944
      %v959 = vadd.f32 %v936, %v944
      %v960 = vadd.f32 %v937, %v944
      %v961 = vadd.f32 %v938, %v944
      %v962 = vmax.f32 %v946, 0.0
      %v963 = vmax.f32 %v947, 0.0
      %v964 = vmax.f32 %v948, 0.0
      %v965 = vmax.f32 %v949, 0.0
      %v966 = vmax.f32 %v950, 0.0
      %v967 = vmax.f32 %v951, 0.0
      %v968 = vmax.f32 %v952, 0.0
      %v969 = vmax.f32 %v953, 0.0
      %v970 = vmax.f32 %v954, 0.0
      %v971 = vmax.f32 %v955, 0.0
      %v972 = vmax.f32 %v956, 0.0
      %v973 = vmax.f32 %v957, 0.0
      %v974 = vmax.f32 %v958, 0.0
      %v975 = vmax.f32 %v959, 0.0
      %v976 = vmax.f32 %v960, 0.0
      %v977 = vmax.f32 %v961, 0.0
      %v978 = vadd.s32 %v856, 8
      %v979 = vld [vmem:[%s4] sm:$0x1]
      %v980 = vlaneseq
      %v981 = vshrl.u32 %v980, 7
      %v982 = vsub.s32 0, %v981
      %v983 = vrot.slane %v979, %v982
      %vm984 = vcmp.lt.s32.totalorder %v856, %v983
      %vm985 = vcmp.lt.s32.totalorder %v978, %v983
      %v986 = vsel %vm984, 1, 0
      %v987 = vsel %vm985, 1, 0
      %v988 = vcvt.s32.f32 %v986
      %v989 = vcvt.s32.f32 %v987
      %v990 = vmul.f32 %v962, %v988
      %v991 = vmul.f32 %v963, %v989
      %v992 = vmul.f32 %v964, %v988
      %v993 = vmul.f32 %v965, %v989
      %v994 = vmul.f32 %v966, %v988
      %v995 = vmul.f32 %v967, %v989
      %v996 = vmul.f32 %v968, %v988
      %v997 = vmul.f32 %v969, %v989
      %v998 = vmul.f32 %v970, %v988
      %v999 = vmul.f32 %v971, %v989
      %v1000 = vmul.f32 %v972, %v988
      %v1001 = vmul.f32 %v973, %v989
      %v1002 = vmul.f32 %v974, %v988
      %v1003 = vmul.f32 %v975, %v989
      %v1004 = vmul.f32 %v976, %v988
      %v1005 = vmul.f32 %v977, %v989
      %v1006 = vmax.f32 %v990, %v991
      %v1007 = vrot.slane %v1006, 4
      %v1008 = vmax.f32 %v1006, %v1007
      %v1009 = vrot.slane %v1008, 2
      %v1010 = vmax.f32 %v1008, %v1009
      %v1011 = vrot.slane %v1010, 1
      %v1012 = vmax.f32 %v1010, %v1011
      %v1013 = vmax.f32 %v992, %v993
      %v1014 = vrot.slane %v1013, 4
      %v1015 = vmax.f32 %v1013, %v1014
      %v1016 = vrot.slane %v1015, 2
      %v1017 = vmax.f32 %v1015, %v1016
      %v1018 = vrot.slane %v1017, 1
      %v1019 = vmax.f32 %v1017, %v1018
      %v1020 = vmax.f32 %v994, %v995
      %v1021 = vrot.slane %v1020, 4
      %v1022 = vmax.f32 %v1020, %v1021
      %v1023 = vrot.slane %v1022, 2
      %v1024 = vmax.f32 %v1022, %v1023
      %v1025 = vrot.slane %v1024, 1
      %v1026 = vmax.f32 %v1024, %v1025
      %v1027 = vmax.f32 %v996, %v997
      %v1028 = vrot.slane %v1027, 4
      %v1029 = vmax.f32 %v1027, %v1028
      %v1030 = vrot.slane %v1029, 2
      %v1031 = vmax.f32 %v1029, %v1030
      %v1032 = vrot.slane %v1031, 1
      %v1033 = vmax.f32 %v1031, %v1032
      %v1034 = vmax.f32 %v998, %v999
      %v1035 = vrot.slane %v1034, 4
      %v1036 = vmax.f32 %v1034, %v1035
      %v1037 = vrot.slane %v1036, 2
      %v1038 = vmax.f32 %v1036, %v1037
      %v1039 = vrot.slane %v1038, 1
      %v1040 = vmax.f32 %v1038, %v1039
      %v1041 = vmax.f32 %v1000, %v1001
      %v1042 = vrot.slane %v1041, 4
      %v1043 = vmax.f32 %v1041, %v1042
      %v1044 = vrot.slane %v1043, 2
      %v1045 = vmax.f32 %v1043, %v1044
      %v1046 = vrot.slane %v1045, 1
      %v1047 = vmax.f32 %v1045, %v1046
      %v1048 = vmax.f32 %v1002, %v1003
      %v1049 = vrot.slane %v1048, 4
      %v1050 = vmax.f32 %v1048, %v1049
      %v1051 = vrot.slane %v1050, 2
      %v1052 = vmax.f32 %v1050, %v1051
      %v1053 = vrot.slane %v1052, 1
      %v1054 = vmax.f32 %v1052, %v1053
      %v1055 = vmax.f32 %v1004, %v1005
      %v1056 = vrot.slane %v1055, 4
      %v1057 = vmax.f32 %v1055, %v1056
      %v1058 = vrot.slane %v1057, 2
      %v1059 = vmax.f32 %v1057, %v1058
      %v1060 = vrot.slane %v1059, 1
      %v1061 = vmax.f32 %v1059, %v1060
      %v1062 = vld [vmem:[%s5] sm:$0xff]
      %v1063 = vld [vmem:[%s5 + $0x8] sm:$0xff]
      %v1064 = vld [vmem:[%s5 + $0x10] sm:$0xff]
      %v1065 = vld [vmem:[%s5 + $0x18] sm:$0xff]
      %v1066 = vld [vmem:[%s5 + $0x20] sm:$0xff]
      %v1067 = vld [vmem:[%s5 + $0x28] sm:$0xff]
      %v1068 = vld [vmem:[%s5 + $0x30] sm:$0xff]
      %v1069 = vld [vmem:[%s5 + $0x38] sm:$0xff]
      %v1070 = vld [vmem:[%s5 + $0x40] sm:$0xff]
      %v1071 = vld [vmem:[%s5 + $0x48] sm:$0xff]
      %v1072 = vld [vmem:[%s5 + $0x50] sm:$0xff]
      %v1073 = vld [vmem:[%s5 + $0x58] sm:$0xff]
      %v1074 = vld [vmem:[%s5 + $0x60] sm:$0xff]
      %v1075 = vld [vmem:[%s5 + $0x68] sm:$0xff]
      %v1076 = vld [vmem:[%s5 + $0x70] sm:$0xff]
      %v1077 = vld [vmem:[%s5 + $0x78] sm:$0xff]
      %v1078 = vld [vmem:[%s6] sm:$0x1]
      %v1080 = vlaneseq
      %v1081 = vshrl.u32 %v1080, 7
      %v1082 = vsub.s32 0, %v1081
      %v1083 = vrot.slane %v1078, %v1082
      %vm1093 = vcmask 1041409
      %v1094 = vsel %vm1093, %v1019, %v1012
      %vm1095 = vcmask 1042434
      %v1096 = vsel %vm1095, %v1026, %v1094
      %vm1097 = vcmask 1043459
      %v1098 = vsel %vm1097, %v1033, %v1096
      %vm1099 = vcmask 1044484
      %v1100 = vsel %vm1099, %v1040, %v1098
      %vm1101 = vcmask 1045509
      %v1102 = vsel %vm1101, %v1047, %v1100
      %vm1103 = vcmask 1046534
      %v1104 = vsel %vm1103, %v1054, %v1102
      %vm1105 = vcmask 1047559
      %v1106 = vsel %vm1105, %v1061, %v1104
      %1108 = vmatprep.subr.mxu0 0.0
      %1109 = vmatpush1.msra.mxu0 %v1062
      %1110 = vmatprep.subr.mxu0 0.0
      %1111 = vmatpush1.msra.mxu0 %v1063
      %1112 = vmatprep.subr.mxu0 0.0
      %1113 = vmatpush1.msra.mxu0 %v1064
      %1114 = vmatprep.subr.mxu0 0.0
      %1115 = vmatpush1.msra.mxu0 %v1065
      %1116 = vmatprep.subr.mxu0 0.0
      %1117 = vmatpush1.msra.mxu0 %v1066
      %1118 = vmatprep.subr.mxu0 0.0
      %1119 = vmatpush1.msra.mxu0 %v1067
      %1120 = vmatprep.subr.mxu0 0.0
      %1121 = vmatpush1.msra.mxu0 %v1068
      %1122 = vmatprep.subr.mxu0 0.0
      %1123 = vmatpush1.msra.mxu0 %v1069
      %1124 = vmatprep.subr.mxu0 0.0
      %1125 = vmatpush1.msra.mxu0 %v1070
      %1126 = vmatprep.subr.mxu0 0.0
      %1127 = vmatpush1.msra.mxu0 %v1071
      %1128 = vmatprep.subr.mxu0 0.0
      %1129 = vmatpush1.msra.mxu0 %v1072
      %1130 = vmatprep.subr.mxu0 0.0
      %1131 = vmatpush1.msra.mxu0 %v1073
      %1132 = vmatprep.subr.mxu0 0.0
      %1133 = vmatpush1.msra.mxu0 %v1074
      %1134 = vmatprep.subr.mxu0 0.0
      %1135 = vmatpush1.msra.mxu0 %v1075
      %1136 = vmatprep.subr.mxu0 0.0
      %1137 = vmatpush1.msra.mxu0 %v1076
      %1138 = vmatprep.subr.mxu0 0.0
      %1139 = vmatpush1.msra.mxu0 %v1077
      %1140 = vmatprep.subr.mxu0 0.0
      %1141 = vmatpush1.msra.mxu0 0.0
      %1142 = vmatprep.subr.mxu0 0.0
      %1143 = vmatpush1.msra.mxu0 0.0
      %1144 = vmatprep.subr.mxu0 0.0
      %1145 = vmatpush1.msra.mxu0 0.0
      %1146 = vmatprep.subr.mxu0 0.0
      %1147 = vmatpush1.msra.mxu0 0.0
      %1148 = vmatprep.subr.mxu0 0.0
      %1149 = vmatpush1.msra.mxu0 0.0
      %1150 = vmatprep.subr.mxu0 0.0
      %1151 = vmatpush1.msra.mxu0 0.0
      %1152 = vmatprep.subr.mxu0 0.0
      %1153 = vmatpush1.msra.mxu0 0.0
      %1154 = vmatprep.subr.mxu0 0.0
      %1155 = vmatpush1.msra.mxu0 0.0
      %1156 = vmatprep.subr.mxu0 0.0
      %1157 = vmatpush1.msra.mxu0 0.0
      %1158 = vmatprep.subr.mxu0 0.0
      %1159 = vmatpush1.msra.mxu0 0.0
      %1160 = vmatprep.subr.mxu0 0.0
      %1161 = vmatpush1.msra.mxu0 0.0
      %1162 = vmatprep.subr.mxu0 0.0
      %1163 = vmatpush1.msra.mxu0 0.0
      %1164 = vmatprep.subr.mxu0 0.0
      %1165 = vmatpush1.msra.mxu0 0.0
      %1166 = vmatprep.subr.mxu0 0.0
      %1167 = vmatpush1.msra.mxu0 0.0
      %1168 = vmatprep.subr.mxu0 0.0
      %1169 = vmatpush1.msra.mxu0 0.0
      %1170 = vmatprep.subr.mxu0 0.0
      %1171 = vmatpush1.msra.mxu0 0.0
      %1172 = vmatprep.mubr.f32.mxu0 0.0
      %1173 = vmatmul.mubr.f32.gmra.mrb[0].mxu0 %v1106
      %v1174 = vpop.f32.mrb[0].mxu0
      %v1175 = vadd.f32 %v1083, %v1174
      %v1176 = vpop.f32.mrb[0].mxu0
      %1177 = vdwg.mxu0
      %1178 = vst [vmem:[%s278] sm:$0xff] %v1175
      %p1179 = scmp.lt.s32.totalorder %s18, 1
      %s1180 = scalar_select %p1179, %s18, 1
      %s1181 = smul.addr %s1180, 8
      %s1182 = scalar_lea.vmem %s7, %s1181
      // Predicated region
      $region49: #{cnn_baseline_forward.1} parent=47 // pred_check
        %p1183 = pneg %p188
      $region50: #{cnn_baseline_forward.1} parent=47 // pred_check_branch
        %1185 = sbr.rel (%p1183) target = $region52
      $region51: #{cnn_baseline_forward.1} parent=47 // pred_region
        _
      $region52: #{cnn_baseline_forward.1} parent=47 // pred_fallthru
        _
    $region48: #{cnn_baseline_forward.1} parent=5 // pred_fallthru
      _
    %p1186 = scmp.le.s32.totalorder 2, %s13
    // Predicated region
    $region53: #{cnn_baseline_forward.1} parent=5 // pred_check
      %p1187 = pneg %p1186
    $region54: #{cnn_baseline_forward.1} parent=5 // pred_check_branch
      %1189 = sbr.rel (%p1187) target = $region56
    $region55: #{cnn_baseline_forward.1} parent=5 // pred_region
      %s1190 = ssub.s32 %s13, 2
      // Predicated region
      $region57: #{cnn_baseline_forward.1} parent=55 // pred_check
        %p1191 = pneg %p194
      $region58: #{cnn_baseline_forward.1} parent=55 // pred_check_branch
        %1193 = sbr.rel (%p1191) target = $region60
      $region59: #{cnn_baseline_forward.1} parent=55 // pred_region
        %p1194 = scmp.lt.s32.totalorder %s19, 1
        %s1195 = scalar_select %p1194, %s19, 1
        %s1196 = smul.addr %s1195, 8
        %s1197 = scalar_lea.vmem %s7, %s1196
      $region60: #{cnn_baseline_forward.1} parent=55 // pred_fallthru
        _
    $region56: #{cnn_baseline_forward.1} parent=5 // pred_fallthru
      _
  $region6: #{cnn_baseline_forward.1} parent=0 // loop_footer
    %s17 = sadd.s32 1, %s13
  $region7: #{cnn_baseline_forward.1} parent=0 // loop_footer_branch
    %12 = sbr.rel target = $region3
  $region8: #{cnn_baseline_forward.1} parent=0 // loop_exit
    _

</llo_original>
